<compile_context>
chip_gen: v5e
topology: v5e:2x2
jax: 0.10.0
libtpu: 0.0.40
codegen_flags: <defaults>
</compile_context>

<pallas_src>
import jax
import jax.numpy as jnp
import numpy as np
from jax import lax
from jax.experimental import pallas as pl
from jax.experimental.pallas import tpu as pltpu


def _round_up(x, m):
    return ((x + m - 1) // m) * m


def _make_kernel(*, with_attn: bool, mm_dtype):
    """Kernel for grid = (B, num_q_tiles, num_k_tiles)."""

    def cast(x):
        return x if mm_dtype is None else x.astype(mm_dtype)

    def kernel(vl_ref,                     # scalar prefetch (SMEM): (B,) int32
               qp_ref,                     # (tq, H)   query projection
               kpt_ref,                    # (H, tk)   key projection, transposed
               v_ref,                      # (tk, Dv)  values
               wv_ref,                     # (H,)      w_v in SMEM
               *rest):
        if with_attn:
            (out_ref, attn_ref, mh_ref, lfin_ref,
             m_scr, l_scr, acc_scr) = rest
        else:
            out_ref, m_scr, l_scr, acc_scr = rest

        b = pl.program_id(0)
        kt = pl.program_id(2)
        num_kt = pl.num_programs(2)
        tk = kpt_ref.shape[-1]
        hidden = qp_ref.shape[-1]

        # ---- per-(b, q-tile) init of the online-softmax state ----
        @pl.when(kt == 0)
        def _init():
            m_scr[...] = jnp.full_like(m_scr, -jnp.inf)
            l_scr[...] = jnp.zeros_like(l_scr)
            acc_scr[...] = jnp.zeros_like(acc_scr)

        qp = qp_ref[...]          # (tq, H)  (f32 or bf16)
        kpt = kpt_ref[...]        # (H, tk)

        # scores[i, j] = sum_h w_v[h] * tanh(qp[i, h] + kp[j, h])
        # Static unroll over the true hidden size: every term is a dense
        # lane-major (tq, tk) tile -> the EUP does exactly tq*tk*H tanh
        # evaluations, with the (tq,1)/(1,tk) broadcasts riding XLU/VPU slots.
        scores = None
        for h in range(hidden):
            f = jnp.tanh(qp[:, h:h + 1] + kpt[h:h + 1, :])        # (tq, tk)
            term = wv_ref[h] * f.astype(jnp.float32)
            scores = term if scores is None else scores + term

        # Masked-softmax sentinel (same as d2l.sequence_mask(value=-1e6)).
        vl = vl_ref[b]
        kidx = kt * tk + lax.broadcasted_iota(jnp.int32, scores.shape, 1)
        scores = jnp.where(kidx < vl, scores, jnp.float32(-1e6))

        # ---- online (flash-style) softmax update ----
        m_prev = m_scr[...]                                       # (tq, 1)
        m_new = jnp.maximum(m_prev, jnp.max(scores, axis=-1, keepdims=True))
        alpha = jnp.exp(m_prev - m_new)
        p = jnp.exp(scores - m_new)                               # (tq, tk)
        l_scr[...] = alpha * l_scr[...] + jnp.sum(p, axis=-1, keepdims=True)
        acc_scr[...] = alpha * acc_scr[...] + jnp.dot(
            cast(p), cast(v_ref[...]), preferred_element_type=jnp.float32)
        m_scr[...] = m_new

        if with_attn:
            # Stream un-normalized probabilities + per-tile running max +
            # running denominator; the wrapper applies
            # exp(m_tile - m_final) / l_final in one fused XLA pass.
            attn_ref[...] = p.astype(attn_ref.dtype)
            mh_ref[...] = m_new
            lfin_ref[...] = l_scr[...]

        # ---- finalize the bmm output on the last K tile ----
        @pl.when(kt == num_kt - 1)
        def _fin():
            inv_l = pl.reciprocal(l_scr[...], approx=True)
            out_ref[...] = (acc_scr[...] * inv_l).astype(out_ref.dtype)

    return kernel


def additive_attention(queries, keys, values, valid_lens, Wq, Wk, wv, *,
                       return_attention=True, q_tile=None, k_tile=None,
                       feature_dtype=None, matmul_dtype=None):
    """AdditiveAttention forward.  Returns out (and attention weights)."""
    B, Q, _ = queries.shape
    _, K, _ = keys.shape
    Dv = values.shape[-1]
    H = Wq.shape[-1]

    # ---- hoisted projections (tiny matmuls; left to XLA) ----
    qp = jnp.einsum("bqd,dh->bqh", queries, Wq)          # (B, Q, H)
    kpt = jnp.einsum("bkd,dh->bhk", keys, Wk)            # (B, H, K)
    if feature_dtype is not None:                        # bf16 tanh phase (v6e/v7x)
        qp = qp.astype(feature_dtype)
        kpt = kpt.astype(feature_dtype)
    wv_flat = jnp.reshape(wv, (H,)).astype(jnp.float32)
    vals = values.astype(jnp.float32)
    vls = valid_lens.astype(jnp.int32)

    # ---- tile sizes ----
    q_align = max(8, 32 // qp.dtype.itemsize)            # 8 for f32, 16 for bf16
    if q_tile is None:
        q_tile = 128
    tq = max(q_align, _round_up(min(q_tile, Q), q_align))
    if k_tile is None:
        k_tile = 128                                     # use 256 on v6e/v7x
    tk = max(128, _round_up(min(k_tile, K), 128))
    Qp = _round_up(Q, tq)
    Kp = _round_up(K, tk)
    num_qt = Qp // tq
    num_kt = Kp // tk

    # zero-padding is exact: padded K columns are masked, padded Q rows sliced.
    qp = jnp.pad(qp, ((0, 0), (0, Qp - Q), (0, 0)))
    kpt = jnp.pad(kpt, ((0, 0), (0, 0), (0, Kp - K)))
    vals = jnp.pad(vals, ((0, 0), (0, Kp - K), (0, 0)))

    kernel = _make_kernel(with_attn=return_attention, mm_dtype=matmul_dtype)

    out_shapes = [jax.ShapeDtypeStruct((B, Qp, Dv), jnp.float32)]
    out_specs = [pl.BlockSpec((None, tq, Dv), lambda b, qi, kt, vl: (b, qi, 0))]
    if return_attention:
        out_shapes += [
            jax.ShapeDtypeStruct((B, Qp, Kp), jnp.float32),         # un-normalized p
            jax.ShapeDtypeStruct((B, num_kt, Qp, 1), jnp.float32),  # running max / tile
            jax.ShapeDtypeStruct((B, Qp, 1), jnp.float32),          # final denominator
        ]
        out_specs += [
            pl.BlockSpec((None, tq, tk), lambda b, qi, kt, vl: (b, qi, kt)),
            pl.BlockSpec((None, None, tq, 1), lambda b, qi, kt, vl: (b, kt, qi, 0)),
            pl.BlockSpec((None, tq, 1), lambda b, qi, kt, vl: (b, qi, 0)),
        ]

    # ---- VMEM budget -> explicit limit (cap below v7x's 64 MiB) ----
    itm = qp.dtype.itemsize
    est = (2 * (tq * H * itm + H * tk * itm + tk * Dv * 4)    # double-buffered inputs
           + 2 * tq * Dv * 4                                  # bmm output block
           + 6 * tq * tk * 4                                  # score/p temporaries
           + tq * (2 * 128 + max(Dv, 128)) * 4)               # m/l/acc scratch (lane-padded)
    if return_attention:
        est += 2 * (tq * tk + 2 * tq * 128) * 4               # attn/mh/l output blocks
    vmem_limit = int(min(56 * 2**20, max(32 * 2**20, 2 * est)))

    grid_spec = pltpu.PrefetchScalarGridSpec(
        num_scalar_prefetch=1,
        grid=(B, num_qt, num_kt),                  # K (reduction) axis last
        in_specs=[
            pl.BlockSpec((None, tq, H), lambda b, qi, kt, vl: (b, qi, 0)),
            pl.BlockSpec((None, H, tk), lambda b, qi, kt, vl: (b, 0, kt)),
            pl.BlockSpec((None, tk, Dv), lambda b, qi, kt, vl: (b, kt, 0)),
            pl.BlockSpec(memory_space=pltpu.MemorySpace.SMEM),   # w_v scalars
        ],
        out_specs=out_specs,
        scratch_shapes=[
            pltpu.VMEM((tq, 1), jnp.float32),      # running max
            pltpu.VMEM((tq, 1), jnp.float32),      # running denominator
            pltpu.VMEM((tq, Dv), jnp.float32),     # output accumulator
        ],
    )

    results = pl.pallas_call(
        kernel,
        out_shape=tuple(out_shapes),
        grid_spec=grid_spec,
        compiler_params=pltpu.CompilerParams(
            dimension_semantics=("parallel", "parallel", "arbitrary"),
            vmem_limit_bytes=vmem_limit),
    )(vls, qp, kpt, vals, wv_flat)

    out = results[0][:, :Q, :]
    if not return_attention:
        return out

    attn_raw, mh_raw, l_fin = results[1], results[2], results[3]
    mh = jnp.transpose(mh_raw[..., 0], (0, 2, 1))              # (B, Qp, num_kt)
    m_fin = mh[:, :, -1:]                                      # global max (running)
    scale = jnp.exp(mh - m_fin) / l_fin                        # exact reciprocal
    attn = attn_raw.reshape(B, Qp, num_kt, tk) * scale[:, :, :, None]
    attn = attn.reshape(B, Qp, Kp)[:, :Q, :K]
    return out, attn


def additive_attention_ref(queries, keys, values, valid_lens, Wq, Wk, wv):
    """Pure-JAX reference mirroring the PyTorch module (eval mode)."""
    qp = queries @ Wq
    kp = keys @ Wk
    feat = jnp.tanh(qp[:, :, None, :] + kp[:, None, :, :])
    scores = jnp.squeeze(feat @ wv, axis=-1)                   # (B, Q, K)
    kidx = jnp.arange(scores.shape[-1])
    mask = kidx[None, None, :] < valid_lens[:, None, None]
    scores = jnp.where(mask, scores, -1e6)
    attn = jax.nn.softmax(scores, axis=-1)
    return attn @ values, attn


def _make_case(key, B, Q, K, Dq, Dk, H, Dv, lens, w_scale=0.2):
    kq, kk, kv, kwq, kwk, kwv = jax.random.split(key, 6)
    queries = jax.random.normal(kq, (B, Q, Dq), dtype=jnp.float32)
    keys = jax.random.normal(kk, (B, K, Dk), dtype=jnp.float32)
    values = jax.random.normal(kv, (B, K, Dv), dtype=jnp.float32)
    Wq = jax.random.normal(kwq, (Dq, H), dtype=jnp.float32) * w_scale
    Wk = jax.random.normal(kwk, (Dk, H), dtype=jnp.float32) * w_scale
    wv = jax.random.normal(kwv, (H, 1), dtype=jnp.float32) * w_scale
    valid_lens = jnp.array(lens, dtype=jnp.int32)
    return queries, keys, values, valid_lens, Wq, Wk, wv


if __name__ == "__main__":
    root = jax.random.PRNGKey(0)
    k1, k2 = jax.random.split(root, 2)

    # ---- Case 1: d2l demo shapes (single Q/K tile) ----
    B, Q, K, Dq, Dk, H, Dv = 2, 5, 10, 20, 2, 8, 4
    queries, keys, values, valid_lens, Wq, Wk, wv = _make_case(
        k1, B, Q, K, Dq, Dk, H, Dv, lens=[2, 6], w_scale=0.1)
    values = jnp.tile(
        jnp.arange(K * Dv, dtype=jnp.float32).reshape(1, K, Dv), (B, 1, 1))

    out_r, attn_r = additive_attention_ref(queries, keys, values, valid_lens,
                                           Wq, Wk, wv)
    out, attn = additive_attention(queries, keys, values, valid_lens, Wq, Wk, wv,
                                   return_attention=True)
    out = jax.block_until_ready(out)
    attn = jax.block_until_ready(attn)
    assert np.allclose(np.asarray(out), np.asarray(out_r), atol=2e-2, rtol=2e-3)
    assert np.allclose(np.asarray(attn), np.asarray(attn_r), atol=2e-3)

    # ---- Case 2: multi-tile Q and K (exercises tiling + online softmax) ----
    B2, Q2, K2, Dq2, Dk2, H2, Dv2 = 2, 20, 300, 12, 6, 16, 8
    q2, kk2, v2, vl2, Wq2, Wk2, wv2 = _make_case(
        k2, B2, Q2, K2, Dq2, Dk2, H2, Dv2, lens=[37, 260])
    out_r2, attn_r2 = additive_attention_ref(q2, kk2, v2, vl2, Wq2, Wk2, wv2)

    out2, attn2 = additive_attention(q2, kk2, v2, vl2, Wq2, Wk2, wv2,
                                     return_attention=True, q_tile=8, k_tile=128)
    out2 = jax.block_until_ready(out2)
    attn2 = jax.block_until_ready(attn2)
    assert np.allclose(np.asarray(out2), np.asarray(out_r2), atol=2e-2, rtol=2e-2)
    assert np.allclose(np.asarray(attn2), np.asarray(attn_r2), atol=2e-3)

    out2b = additive_attention(q2, kk2, v2, vl2, Wq2, Wk2, wv2,
                               return_attention=False, q_tile=8, k_tile=128)
    out2b = jax.block_until_ready(out2b)
    assert np.allclose(np.asarray(out2b), np.asarray(out_r2), atol=2e-2, rtol=2e-2)

    # ---- Case 3: bf16 tanh phase + bf16 MXU operands (loose sanity check) ----
    out3, attn3 = additive_attention(q2, kk2, v2, vl2, Wq2, Wk2, wv2,
                                     return_attention=True,
                                     feature_dtype=jnp.bfloat16,
                                     matmul_dtype=jnp.bfloat16)
    out3 = jax.block_until_ready(out3)
    attn3 = jax.block_until_ready(attn3)
    assert np.allclose(np.asarray(out3), np.asarray(out_r2), atol=1.5e-1, rtol=1e-1)
    assert np.allclose(np.asarray(attn3), np.asarray(attn_r2), atol=3e-2)

    print("KERNEL_OK")
</pallas_src>

<mosaic_0001>
module attributes {stable_mosaic.version = 11 : i64} {
  func.func @kernel(%arg0: i32, %arg1: i32, %arg2: i32, %arg3: memref<2xi32, #tpu.memory_space<smem>>, %arg4: memref<1x8x8xf32, #tpu.memory_space<vmem>>, %arg5: memref<1x8x128xf32, #tpu.memory_space<vmem>>, %arg6: memref<1x128x4xf32, #tpu.memory_space<vmem>>, %arg7: memref<8xf32, #tpu.memory_space<smem>>, %arg8: memref<1x8x4xf32, #tpu.memory_space<vmem>>, %arg9: memref<1x8x128xf32, #tpu.memory_space<vmem>>, %arg10: memref<1x1x8x1xf32, #tpu.memory_space<vmem>>, %arg11: memref<1x8x1xf32, #tpu.memory_space<vmem>>, %arg12: memref<8x1xf32, #tpu.memory_space<vmem>>, %arg13: memref<8x1xf32, #tpu.memory_space<vmem>>, %arg14: memref<8x4xf32, #tpu.memory_space<vmem>>) attributes {dimension_semantics = [#tpu.dimension_semantics<parallel>, #tpu.dimension_semantics<parallel>, #tpu.dimension_semantics<arbitrary>], iteration_bounds = array<i64: 2, 1, 1>, scalar_prefetch = 1 : i64, scratch_operands = 3 : i64, tpu.core_type = #tpu.core_type<tc>, window_params = [{transform_indices = @transform_0, window_bounds = array<i64: 1, 8, 8>}, {transform_indices = @transform_1, window_bounds = array<i64: 1, 8, 128>}, {transform_indices = @transform_2, window_bounds = array<i64: 1, 128, 4>}, {transform_indices = @transform_3, window_bounds = array<i64: 8>}, {transform_indices = @transform_4, window_bounds = array<i64: 1, 8, 4>}, {transform_indices = @transform_5, window_bounds = array<i64: 1, 8, 128>}, {transform_indices = @transform_6, window_bounds = array<i64: 1, 1, 8, 1>}, {transform_indices = @transform_7, window_bounds = array<i64: 1, 8, 1>}]} {
    %c0_i32 = arith.constant 0 : i32
    %0 = arith.cmpi eq, %arg2, %c0_i32 : i32
    %1 = arith.extui %0 : i1 to i32
    %c0_i32_0 = arith.constant 0 : i32
    %2 = arith.cmpi ne, %1, %c0_i32_0 : i32
    scf.if %2 {
      %cst_39 = arith.constant 0xFF800000 : f32
      %133 = vector.broadcast %cst_39 : f32 to vector<8x1xf32>
      %c0_40 = arith.constant 0 : index
      %c0_41 = arith.constant 0 : index
      %134 = vector.load %arg12[%c0_40, %c0_41] : memref<8x1xf32, #tpu.memory_space<vmem>>, vector<8x1xf32>
      tpu.vector_store %arg12[%c0_40, %c0_41], %133 {strides = array<i32>} : memref<8x1xf32, #tpu.memory_space<vmem>>, vector<8x1xf32>,
      %cst_42 = arith.constant 0.000000e+00 : f32
      %135 = vector.broadcast %cst_42 : f32 to vector<8x1xf32>
      %c0_43 = arith.constant 0 : index
      %c0_44 = arith.constant 0 : index
      %136 = vector.load %arg13[%c0_43, %c0_44] : memref<8x1xf32, #tpu.memory_space<vmem>>, vector<8x1xf32>
      tpu.vector_store %arg13[%c0_43, %c0_44], %135 {strides = array<i32>} : memref<8x1xf32, #tpu.memory_space<vmem>>, vector<8x1xf32>,
      %cst_45 = arith.constant 0.000000e+00 : f32
      %137 = vector.broadcast %cst_45 : f32 to vector<8x4xf32>
      %c0_46 = arith.constant 0 : index
      %c0_47 = arith.constant 0 : index
      %138 = vector.load %arg14[%c0_46, %c0_47] : memref<8x4xf32, #tpu.memory_space<vmem>>, vector<8x4xf32>
      tpu.vector_store %arg14[%c0_46, %c0_47], %137 {strides = array<i32>} : memref<8x4xf32, #tpu.memory_space<vmem>>, vector<8x4xf32>,
    } else {
    }
    %c0 = arith.constant 0 : index
    %c0_1 = arith.constant 0 : index
    %c0_2 = arith.constant 0 : index
    %3 = vector.load %arg4[%c0, %c0_1, %c0_2] : memref<1x8x8xf32, #tpu.memory_space<vmem>>, vector<1x8x8xf32>
    %4 = vector.shape_cast %3 : vector<1x8x8xf32> to vector<8x8xf32>
    %c0_3 = arith.constant 0 : index
    %c0_4 = arith.constant 0 : index
    %c0_5 = arith.constant 0 : index
    %5 = vector.load %arg5[%c0_3, %c0_4, %c0_5] : memref<1x8x128xf32, #tpu.memory_space<vmem>>, vector<1x8x128xf32>
    %6 = vector.shape_cast %5 : vector<1x8x128xf32> to vector<8x128xf32>
    %7 = vector.extract_strided_slice %4 {offsets = [0, 0], sizes = [8, 1], strides = [1, 1]} : vector<8x8xf32> to vector<8x1xf32>
    %8 = vector.extract_strided_slice %6 {offsets = [0, 0], sizes = [1, 128], strides = [1, 1]} : vector<8x128xf32> to vector<1x128xf32>
    %9 = vector.broadcast %7 : vector<8x1xf32> to vector<8x128xf32>
    %10 = vector.broadcast %8 : vector<1x128xf32> to vector<8x128xf32>
    %11 = arith.addf %9, %10 : vector<8x128xf32>
    %12 = math.tanh %11 : vector<8x128xf32>
    %c0_6 = arith.constant 0 : index
    %13 = memref.load %arg7[%c0_6] : memref<8xf32, #tpu.memory_space<smem>>
    %14 = vector.broadcast %13 : f32 to vector<8x128xf32>
    %15 = arith.mulf %14, %12 : vector<8x128xf32>
    %16 = vector.extract_strided_slice %4 {offsets = [0, 1], sizes = [8, 1], strides = [1, 1]} : vector<8x8xf32> to vector<8x1xf32>
    %17 = vector.extract_strided_slice %6 {offsets = [1, 0], sizes = [1, 128], strides = [1, 1]} : vector<8x128xf32> to vector<1x128xf32>
    %18 = vector.broadcast %16 : vector<8x1xf32> to vector<8x128xf32>
    %19 = vector.broadcast %17 : vector<1x128xf32> to vector<8x128xf32>
    %20 = arith.addf %18, %19 : vector<8x128xf32>
    %21 = math.tanh %20 : vector<8x128xf32>
    %c1 = arith.constant 1 : index
    %22 = memref.load %arg7[%c1] : memref<8xf32, #tpu.memory_space<smem>>
    %23 = vector.broadcast %22 : f32 to vector<8x128xf32>
    %24 = arith.mulf %23, %21 : vector<8x128xf32>
    %25 = arith.addf %15, %24 : vector<8x128xf32>
    %26 = vector.extract_strided_slice %4 {offsets = [0, 2], sizes = [8, 1], strides = [1, 1]} : vector<8x8xf32> to vector<8x1xf32>
    %27 = vector.extract_strided_slice %6 {offsets = [2, 0], sizes = [1, 128], strides = [1, 1]} : vector<8x128xf32> to vector<1x128xf32>
    %28 = vector.broadcast %26 : vector<8x1xf32> to vector<8x128xf32>
    %29 = vector.broadcast %27 : vector<1x128xf32> to vector<8x128xf32>
    %30 = arith.addf %28, %29 : vector<8x128xf32>
    %31 = math.tanh %30 : vector<8x128xf32>
    %c2 = arith.constant 2 : index
    %32 = memref.load %arg7[%c2] : memref<8xf32, #tpu.memory_space<smem>>
    %33 = vector.broadcast %32 : f32 to vector<8x128xf32>
    %34 = arith.mulf %33, %31 : vector<8x128xf32>
    %35 = arith.addf %25, %34 : vector<8x128xf32>
    %36 = vector.extract_strided_slice %4 {offsets = [0, 3], sizes = [8, 1], strides = [1, 1]} : vector<8x8xf32> to vector<8x1xf32>
    %37 = vector.extract_strided_slice %6 {offsets = [3, 0], sizes = [1, 128], strides = [1, 1]} : vector<8x128xf32> to vector<1x128xf32>
    %38 = vector.broadcast %36 : vector<8x1xf32> to vector<8x128xf32>
    %39 = vector.broadcast %37 : vector<1x128xf32> to vector<8x128xf32>
    %40 = arith.addf %38, %39 : vector<8x128xf32>
    %41 = math.tanh %40 : vector<8x128xf32>
    %c3 = arith.constant 3 : index
    %42 = memref.load %arg7[%c3] : memref<8xf32, #tpu.memory_space<smem>>
    %43 = vector.broadcast %42 : f32 to vector<8x128xf32>
    %44 = arith.mulf %43, %41 : vector<8x128xf32>
    %45 = arith.addf %35, %44 : vector<8x128xf32>
    %46 = vector.extract_strided_slice %4 {offsets = [0, 4], sizes = [8, 1], strides = [1, 1]} : vector<8x8xf32> to vector<8x1xf32>
    %47 = vector.extract_strided_slice %6 {offsets = [4, 0], sizes = [1, 128], strides = [1, 1]} : vector<8x128xf32> to vector<1x128xf32>
    %48 = vector.broadcast %46 : vector<8x1xf32> to vector<8x128xf32>
    %49 = vector.broadcast %47 : vector<1x128xf32> to vector<8x128xf32>
    %50 = arith.addf %48, %49 : vector<8x128xf32>
    %51 = math.tanh %50 : vector<8x128xf32>
    %c4 = arith.constant 4 : index
    %52 = memref.load %arg7[%c4] : memref<8xf32, #tpu.memory_space<smem>>
    %53 = vector.broadcast %52 : f32 to vector<8x128xf32>
    %54 = arith.mulf %53, %51 : vector<8x128xf32>
    %55 = arith.addf %45, %54 : vector<8x128xf32>
    %56 = vector.extract_strided_slice %4 {offsets = [0, 5], sizes = [8, 1], strides = [1, 1]} : vector<8x8xf32> to vector<8x1xf32>
    %57 = vector.extract_strided_slice %6 {offsets = [5, 0], sizes = [1, 128], strides = [1, 1]} : vector<8x128xf32> to vector<1x128xf32>
    %58 = vector.broadcast %56 : vector<8x1xf32> to vector<8x128xf32>
    %59 = vector.broadcast %57 : vector<1x128xf32> to vector<8x128xf32>
    %60 = arith.addf %58, %59 : vector<8x128xf32>
    %61 = math.tanh %60 : vector<8x128xf32>
    %c5 = arith.constant 5 : index
    %62 = memref.load %arg7[%c5] : memref<8xf32, #tpu.memory_space<smem>>
    %63 = vector.broadcast %62 : f32 to vector<8x128xf32>
    %64 = arith.mulf %63, %61 : vector<8x128xf32>
    %65 = arith.addf %55, %64 : vector<8x128xf32>
    %66 = vector.extract_strided_slice %4 {offsets = [0, 6], sizes = [8, 1], strides = [1, 1]} : vector<8x8xf32> to vector<8x1xf32>
    %67 = vector.extract_strided_slice %6 {offsets = [6, 0], sizes = [1, 128], strides = [1, 1]} : vector<8x128xf32> to vector<1x128xf32>
    %68 = vector.broadcast %66 : vector<8x1xf32> to vector<8x128xf32>
    %69 = vector.broadcast %67 : vector<1x128xf32> to vector<8x128xf32>
    %70 = arith.addf %68, %69 : vector<8x128xf32>
    %71 = math.tanh %70 : vector<8x128xf32>
    %c6 = arith.constant 6 : index
    %72 = memref.load %arg7[%c6] : memref<8xf32, #tpu.memory_space<smem>>
    %73 = vector.broadcast %72 : f32 to vector<8x128xf32>
    %74 = arith.mulf %73, %71 : vector<8x128xf32>
    %75 = arith.addf %65, %74 : vector<8x128xf32>
    %76 = vector.extract_strided_slice %4 {offsets = [0, 7], sizes = [8, 1], strides = [1, 1]} : vector<8x8xf32> to vector<8x1xf32>
    %77 = vector.extract_strided_slice %6 {offsets = [7, 0], sizes = [1, 128], strides = [1, 1]} : vector<8x128xf32> to vector<1x128xf32>
    %78 = vector.broadcast %76 : vector<8x1xf32> to vector<8x128xf32>
    %79 = vector.broadcast %77 : vector<1x128xf32> to vector<8x128xf32>
    %80 = arith.addf %78, %79 : vector<8x128xf32>
    %81 = math.tanh %80 : vector<8x128xf32>
    %c7 = arith.constant 7 : index
    %82 = memref.load %arg7[%c7] : memref<8xf32, #tpu.memory_space<smem>>
    %83 = vector.broadcast %82 : f32 to vector<8x128xf32>
    %84 = arith.mulf %83, %81 : vector<8x128xf32>
    %85 = arith.addf %75, %84 : vector<8x128xf32>
    %86 = arith.index_cast %arg0 : i32 to index
    %87 = memref.load %arg3[%86] : memref<2xi32, #tpu.memory_space<smem>>
    %c128_i32 = arith.constant 128 : i32
    %88 = arith.muli %arg2, %c128_i32 : i32
    %89 = tpu.iota {dimensions = array<i32: 1>} : vector<8x128xi32>
    %90 = vector.broadcast %88 : i32 to vector<8x128xi32>
    %91 = arith.addi %90, %89 : vector<8x128xi32>
    %92 = vector.broadcast %87 : i32 to vector<8x128xi32>
    %93 = arith.cmpi slt, %91, %92 : vector<8x128xi32>
    %cst = arith.constant -1.000000e+06 : f32
    %94 = vector.broadcast %cst : f32 to vector<8x128xf32>
    %95 = arith.select %93, %85, %94 : vector<8x128xi1>, vector<8x128xf32>
    %c0_7 = arith.constant 0 : index
    %c0_8 = arith.constant 0 : index
    %96 = vector.load %arg12[%c0_7, %c0_8] : memref<8x1xf32, #tpu.memory_space<vmem>>, vector<8x1xf32>
    %cst_9 = arith.constant dense<0xFF800000> : vector<8xf32>
    %97 = vector.multi_reduction <maximumf>, %95, %cst_9 [1] : vector<8x128xf32> to vector<8xf32>
    %98 = vector.shape_cast %97 : vector<8xf32> to vector<8x1xf32>
    %99 = arith.maximumf %96, %98 : vector<8x1xf32>
    %100 = arith.subf %96, %99 : vector<8x1xf32>
    %101 = math.exp %100 : vector<8x1xf32>
    %102 = vector.broadcast %99 : vector<8x1xf32> to vector<8x128xf32>
    %103 = arith.subf %95, %102 : vector<8x128xf32>
    %104 = math.exp %103 : vector<8x128xf32>
    %c0_10 = arith.constant 0 : index
    %c0_11 = arith.constant 0 : index
    %105 = vector.load %arg13[%c0_10, %c0_11] : memref<8x1xf32, #tpu.memory_space<vmem>>, vector<8x1xf32>
    %106 = arith.mulf %101, %105 : vector<8x1xf32>
    %cst_12 = arith.constant dense<0.000000e+00> : vector<8xf32>
    %107 = vector.multi_reduction <add>, %104, %cst_12 [1] : vector<8x128xf32> to vector<8xf32>
    %108 = vector.shape_cast %107 : vector<8xf32> to vector<8x1xf32>
    %109 = arith.addf %106, %108 : vector<8x1xf32>
    %c0_13 = arith.constant 0 : index
    %c0_14 = arith.constant 0 : index
    %110 = vector.load %arg13[%c0_13, %c0_14] : memref<8x1xf32, #tpu.memory_space<vmem>>, vector<8x1xf32>
    tpu.vector_store %arg13[%c0_13, %c0_14], %109 {strides = array<i32>} : memref<8x1xf32, #tpu.memory_space<vmem>>, vector<8x1xf32>,
    %c0_15 = arith.constant 0 : index
    %c0_16 = arith.constant 0 : index
    %111 = vector.load %arg14[%c0_15, %c0_16] : memref<8x4xf32, #tpu.memory_space<vmem>>, vector<8x4xf32>
    %112 = vector.broadcast %101 : vector<8x1xf32> to vector<8x4xf32>
    %113 = arith.mulf %112, %111 : vector<8x4xf32>
    %c0_17 = arith.constant 0 : index
    %c0_18 = arith.constant 0 : index
    %c0_19 = arith.constant 0 : index
    %114 = vector.load %arg6[%c0_17, %c0_18, %c0_19] : memref<1x128x4xf32, #tpu.memory_space<vmem>>, vector<1x128x4xf32>
    %115 = vector.shape_cast %114 : vector<1x128x4xf32> to vector<128x4xf32>
    %cst_20 = arith.constant dense<0.000000e+00> : vector<8x4xf32>
    %116 = tpu.matmul %104, %115, %cst_20 {dimension_numbers = #tpu.dot_dimension_numbers<[1], [0], [0], [1], [0, 0, 1, 1], [], []>} : vector<8x128xf32>, vector<128x4xf32>, vector<8x4xf32> -> vector<8x4xf32>
    %117 = arith.addf %113, %116 : vector<8x4xf32>
    %c0_21 = arith.constant 0 : index
    %c0_22 = arith.constant 0 : index
    %118 = vector.load %arg14[%c0_21, %c0_22] : memref<8x4xf32, #tpu.memory_space<vmem>>, vector<8x4xf32>
    tpu.vector_store %arg14[%c0_21, %c0_22], %117 {strides = array<i32>} : memref<8x4xf32, #tpu.memory_space<vmem>>, vector<8x4xf32>,
    %c0_23 = arith.constant 0 : index
    %c0_24 = arith.constant 0 : index
    %119 = vector.load %arg12[%c0_23, %c0_24] : memref<8x1xf32, #tpu.memory_space<vmem>>, vector<8x1xf32>
    tpu.vector_store %arg12[%c0_23, %c0_24], %99 {strides = array<i32>} : memref<8x1xf32, #tpu.memory_space<vmem>>, vector<8x1xf32>,
    %c0_25 = arith.constant 0 : index
    %c0_26 = arith.constant 0 : index
    %c0_27 = arith.constant 0 : index
    %120 = vector.load %arg9[%c0_25, %c0_26, %c0_27] : memref<1x8x128xf32, #tpu.memory_space<vmem>>, vector<1x8x128xf32>
    %121 = vector.shape_cast %120 : vector<1x8x128xf32> to vector<8x128xf32>
    %122 = vector.shape_cast %104 : vector<8x128xf32> to vector<1x8x128xf32>
    tpu.vector_store %arg9[%c0_25, %c0_26, %c0_27], %122 {strides = array<i32>} : memref<1x8x128xf32, #tpu.memory_space<vmem>>, vector<1x8x128xf32>,
    %c0_28 = arith.constant 0 : index
    %c0_29 = arith.constant 0 : index
    %c0_30 = arith.constant 0 : index
    %c0_31 = arith.constant 0 : index
    %123 = vector.load %arg10[%c0_28, %c0_29, %c0_30, %c0_31] : memref<1x1x8x1xf32, #tpu.memory_space<vmem>>, vector<1x1x8x1xf32>
    %124 = vector.shape_cast %123 : vector<1x1x8x1xf32> to vector<8x1xf32>
    %125 = vector.shape_cast %99 : vector<8x1xf32> to vector<1x1x8x1xf32>
    tpu.vector_store %arg10[%c0_28, %c0_29, %c0_30, %c0_31], %125 {strides = array<i32>} : memref<1x1x8x1xf32, #tpu.memory_space<vmem>>, vector<1x1x8x1xf32>,
    %c0_32 = arith.constant 0 : index
    %c0_33 = arith.constant 0 : index
    %126 = vector.load %arg13[%c0_32, %c0_33] : memref<8x1xf32, #tpu.memory_space<vmem>>, vector<8x1xf32>
    %c0_34 = arith.constant 0 : index
    %c0_35 = arith.constant 0 : index
    %c0_36 = arith.constant 0 : index
    %127 = vector.load %arg11[%c0_34, %c0_35, %c0_36] : memref<1x8x1xf32, #tpu.memory_space<vmem>>, vector<1x8x1xf32>
    %128 = vector.shape_cast %127 : vector<1x8x1xf32> to vector<8x1xf32>
    %129 = vector.shape_cast %126 : vector<8x1xf32> to vector<1x8x1xf32>
    tpu.vector_store %arg11[%c0_34, %c0_35, %c0_36], %129 {strides = array<i32>} : memref<1x8x1xf32, #tpu.memory_space<vmem>>, vector<1x8x1xf32>,
    %c0_i32_37 = arith.constant 0 : i32
    %130 = arith.cmpi eq, %arg2, %c0_i32_37 : i32
    %131 = arith.extui %130 : i1 to i32
    %c0_i32_38 = arith.constant 0 : i32
    %132 = arith.cmpi ne, %131, %c0_i32_38 : i32
    scf.if %132 {
      %c0_39 = arith.constant 0 : index
      %c0_40 = arith.constant 0 : index
      %133 = vector.load %arg13[%c0_39, %c0_40] : memref<8x1xf32, #tpu.memory_space<vmem>>, vector<8x1xf32>
      %134 = tpu.reciprocal %133 {approx = true} : vector<8x1xf32> -> vector<8x1xf32>
      %c0_41 = arith.constant 0 : index
      %c0_42 = arith.constant 0 : index
      %135 = vector.load %arg14[%c0_41, %c0_42] : memref<8x4xf32, #tpu.memory_space<vmem>>, vector<8x4xf32>
      %136 = vector.broadcast %134 : vector<8x1xf32> to vector<8x4xf32>
      %137 = arith.mulf %135, %136 : vector<8x4xf32>
      %c0_43 = arith.constant 0 : index
      %c0_44 = arith.constant 0 : index
      %c0_45 = arith.constant 0 : index
      %138 = vector.load %arg8[%c0_43, %c0_44, %c0_45] : memref<1x8x4xf32, #tpu.memory_space<vmem>>, vector<1x8x4xf32>
      %139 = vector.shape_cast %138 : vector<1x8x4xf32> to vector<8x4xf32>
      %140 = vector.shape_cast %137 : vector<8x4xf32> to vector<1x8x4xf32>
      tpu.vector_store %arg8[%c0_43, %c0_44, %c0_45], %140 {strides = array<i32>} : memref<1x8x4xf32, #tpu.memory_space<vmem>>, vector<1x8x4xf32>,
    } else {
    }
    return
  }
  func.func @transform_0(%arg0: i32, %arg1: i32, %arg2: i32, %arg3: memref<2xi32, #tpu.memory_space<smem>>) -> (i32, i32, i32) {
    %c0_i32 = arith.constant 0 : i32
    %c0_i32_0 = arith.constant 0 : i32
    return %arg0, %arg1, %c0_i32 : i32, i32, i32
  }
  func.func @transform_1(%arg0: i32, %arg1: i32, %arg2: i32, %arg3: memref<2xi32, #tpu.memory_space<smem>>) -> (i32, i32, i32) {
    %c0_i32 = arith.constant 0 : i32
    %c0_i32_0 = arith.constant 0 : i32
    return %arg0, %c0_i32, %arg2 : i32, i32, i32
  }
  func.func @transform_2(%arg0: i32, %arg1: i32, %arg2: i32, %arg3: memref<2xi32, #tpu.memory_space<smem>>) -> (i32, i32, i32) {
    %c0_i32 = arith.constant 0 : i32
    %c0_i32_0 = arith.constant 0 : i32
    return %arg0, %arg2, %c0_i32 : i32, i32, i32
  }
  func.func @transform_3(%arg0: i32, %arg1: i32, %arg2: i32, %arg3: memref<2xi32, #tpu.memory_space<smem>>) -> i32 {
    %c0_i32 = arith.constant 0 : i32
    %c0_i32_0 = arith.constant 0 : i32
    return %c0_i32 : i32
  }
  func.func @transform_4(%arg0: i32, %arg1: i32, %arg2: i32, %arg3: memref<2xi32, #tpu.memory_space<smem>>) -> (i32, i32, i32) {
    %c0_i32 = arith.constant 0 : i32
    %c0_i32_0 = arith.constant 0 : i32
    return %arg0, %arg1, %c0_i32 : i32, i32, i32
  }
  func.func @transform_5(%arg0: i32, %arg1: i32, %arg2: i32, %arg3: memref<2xi32, #tpu.memory_space<smem>>) -> (i32, i32, i32) {
    %c0_i32 = arith.constant 0 : i32
    return %arg0, %arg1, %arg2 : i32, i32, i32
  }
  func.func @transform_6(%arg0: i32, %arg1: i32, %arg2: i32, %arg3: memref<2xi32, #tpu.memory_space<smem>>) -> (i32, i32, i32, i32) {
    %c0_i32 = arith.constant 0 : i32
    %c0_i32_0 = arith.constant 0 : i32
    return %arg0, %arg2, %arg1, %c0_i32 : i32, i32, i32, i32
  }
  func.func @transform_7(%arg0: i32, %arg1: i32, %arg2: i32, %arg3: memref<2xi32, #tpu.memory_space<smem>>) -> (i32, i32, i32) {
    %c0_i32 = arith.constant 0 : i32
    %c0_i32_0 = arith.constant 0 : i32
    return %arg0, %arg1, %c0_i32 : i32, i32, i32
  }
}

</mosaic_0001>

<llo_original>
// kernel: tpu_custom_call.1
$region0: #{tpu_custom_call.1}
  #allocation0 [shape = 'u32[]', space=smem, size = 0x4, offset = 0x4, fixed_abs, tag = 'smem constant byte address 0x4 - core index']
  #allocation1 [shape = 'u32[72,128]{1,0:T(1,128)}', space=vmem, size = 0x9000, scoped, tag = 'internal scratch']
  #allocation2 [shape = 'f32[8,1]{1,0:T(8,128)}', space=vmem, size = 0x1000, scoped, tag = 'scratch operand']
  #allocation3 [shape = 'f32[8,1]{1,0:T(8,128)}', space=vmem, size = 0x1000, scoped, tag = 'scratch operand']
  #allocation4 [shape = 'f32[8,4]{1,0:T(8,128)}', space=vmem, size = 0x1000, scoped, tag = 'scratch operand']
  #allocation5 [shape = 's32[1]{0}', space=sflag, size = 0x4, scoped, tag = 'scoped memory for tpu_custom_call.1']
  #allocation6 [shape = 'u8[512]{0}', space=smem, size = 0x200, scoped, tag = 'prefetched SMEM operand 0']
  %s0 = inlined_call_operand.vmem [shape: s32[2], index: 0, kind: input, shape index: {}]
  %s1 = inlined_call_operand.vmem [shape: f32[2,8,8], index: 1, kind: input, shape index: {}]
  %s2 = inlined_call_operand.vmem [shape: f32[2,8,128], index: 2, kind: input, shape index: {}]
  %s3 = inlined_call_operand.vmem [shape: f32[2,128,4], index: 3, kind: input, shape index: {}]
  %s4 = inlined_call_operand.vmem [shape: f32[8], index: 4, kind: input, shape index: {}]
  %s5 = inlined_call_operand.vmem [shape: f32[2,8,4], index: 5, kind: output, shape index: {0}]
  %s6 = inlined_call_operand.hbm [shape: f32[2,8,128], index: 6, kind: output, shape index: {1}]
  %s7 = inlined_call_operand.vmem [shape: f32[2,1,8,1], index: 7, kind: output, shape index: {2}]
  %s8 = inlined_call_operand.vmem [shape: f32[2,8,1], index: 8, kind: output, shape index: {3}]
  %9 = xla_tuple %s5, %s6, %s7, %s8
  %s10 = sld [smem:[#allocation0]]
  $region85: #{tpu_custom_call.1} parent=0
    _
  %s12 = ssub.s32 1, %s10
  %s13 = scalar_select 0, %s12, %s10
  %s15 = sshll.u32 %s0, 4
  %s16 = int_to_ptr.vmem [resolvable:$true] %s15
  %18 = dma.vmem_to_smem %s16, 16, [#allocation6], [#allocation5]
  %20 = dma.done [#allocation5], 16
  %21 = sfence
  $region1: #{tpu_custom_call.1} parent=0
    #allocation7 [shape = 'u8[512]{0}', space=smem, size = 0x200, scoped, tag = 'input window, operand 4, single buffered']
    #allocation8 [shape = 's32[2]{0}', space=sflag, size = 0x8, scoped, tag = 'scoped memory for tpu_custom_call.1']
    #allocation9 [shape = 's32[2]{0}', space=sflag, size = 0x8, scoped, tag = 'scoped memory for tpu_custom_call.1']
    #allocation10 [shape = 'u8[8192]{0}', space=vmem, size = 0x2000, scoped, tag = 'output window, operand 1']
    %22 = vsyncpa [#allocation9], 0
    %23 = vsyncpa [#allocation8], 0
    %s24 = scalar_lea.sflag [#allocation8], 1
    %25 = vsyncpa %s24, 0
    loop: start=0, step=1, limit=4
    $region2: #{tpu_custom_call.1} parent=1 // loop_pre_header
      _
    $region3: #{tpu_custom_call.1} parent=1 // loop_header
      %s27 = sphi 0, %s31
      %p28 = scmp.ge.s32.totalorder %s27, 4
      %s34 = sphi 0, %s53
      %s35 = sphi 0, %s49
      %s36 = sphi 0, %s45
      %s37 = sphi 0, %s34
      %s38 = sphi 0, %s35
      %s39 = sphi 0, %s36
      %s40 = sphi 0, %s37
      %s41 = sphi 0, %s38
      %s42 = sphi 0, %s39
      %s58 = sphi 0, %s60
      %s61 = sphi 0, %s58
      %s62 = sphi 0, %s61
      %s78 = sphi 0, %s62
      %s86 = sphi 0, %s88
      %s89 = sphi 0, %s86
      %s90 = sphi 0, %s89
      %s106 = sphi 0, %s90
      %s114 = sphi 0, %s116
      %s117 = sphi 0, %s114
      %s118 = sphi 0, %s117
      %s134 = sphi 0, %s118
      %s138 = sphi 0, %s138
      %s140 = sphi 0, %s138
      %s141 = sphi 0, %s140
      %s155 = sphi 0, %s141
      %s163 = sphi 0, %s165
      %s166 = sphi 0, %s163
      %s167 = sphi 0, %s166
      %s183 = sphi 0, %s167
      %s193 = sphi 0, %s195
      %s196 = sphi 0, %s193
      %s197 = sphi 0, %s196
      %s213 = sphi 0, %s197
      %s223 = sphi 0, %s225
      %s226 = sphi 0, %s223
      %s227 = sphi 0, %s226
      %s243 = sphi 0, %s227
      %s251 = sphi 0, %s253
      %s254 = sphi 0, %s251
      %s255 = sphi 0, %s254
      %s271 = sphi 0, %s255
    $region4: #{tpu_custom_call.1} parent=1 // loop_header_branch
      %30 = sbr.rel (%p28) target = $region8
    $region5: #{tpu_custom_call.1} parent=1 // loop_body
      %s32 = ssub.s32 %s27, 1
      %s33 = ssub.s32 %s27, 2
      %s43 = sadd.s32 1, %s36
      %p44 = scmp.ge.s32.totalorder %s43, 1
      %s45 = scalar_select %p44, 0, %s43
      %s46 = sadd.s32 1, %s35
      %s47 = scalar_select %p44, %s46, %s35
      %p48 = scmp.ge.s32.totalorder %s47, 1
      %s49 = scalar_select %p48, 0, %s47
      %s50 = sadd.s32 1, %s34
      %s51 = scalar_select %p48, %s50, %s34
      %p52 = scmp.ge.s32.totalorder %s51, 2
      %s53 = scalar_select %p52, 0, %s51
      %s54 = ssub.s32 %s34, %s53
      %s55 = ssub.s32 %s35, %s49
      %s56 = sor.u32 %s54, %s55
      %p57 = scmp.eq.s32.totalorder %s56, 0
      %s59 = sadd.s32 %s58, 1
      %s60 = scalar_select %p57, %s58, %s59
      %p63 = pneg %p57
      %p64 = scmp.eq.s32.totalorder %s27, 1
      %p65 = por %p63, %p64
      %p66 = scmp.ne.s32.totalorder %s58, %s61
      %p67 = scmp.eq.s32.totalorder %s27, 0
      %p68 = por %p66, %p67
      %p69 = scmp.ne.s32.totalorder %s58, %s61
      %p70 = scmp.eq.s32.totalorder %s32, 1
      %p71 = por %p69, %p70
      %p72 = scmp.ne.s32.totalorder %s61, %s62
      %p73 = scmp.eq.s32.totalorder %s32, 0
      %p74 = por %p72, %p73
      %p75 = scmp.ne.s32.totalorder %s61, %s62
      %p76 = scmp.eq.s32.totalorder %s33, 1
      %p77 = por %p75, %p76
      %p79 = scmp.ne.s32.totalorder %s62, %s78
      %p80 = scmp.eq.s32.totalorder %s33, 0
      %p81 = por %p79, %p80
      %s82 = ssub.s32 %s34, %s53
      %s83 = ssub.s32 %s36, %s45
      %s84 = sor.u32 %s82, %s83
      %p85 = scmp.eq.s32.totalorder %s84, 0
      %s87 = sadd.s32 %s86, 1
      %s88 = scalar_select %p85, %s86, %s87
      %p91 = pneg %p85
      %p92 = scmp.eq.s32.totalorder %s27, 1
      %p93 = por %p91, %p92
      %p94 = scmp.ne.s32.totalorder %s86, %s89
      %p95 = scmp.eq.s32.totalorder %s27, 0
      %p96 = por %p94, %p95
      %p97 = scmp.ne.s32.totalorder %s86, %s89
      %p98 = scmp.eq.s32.totalorder %s32, 1
      %p99 = por %p97, %p98
      %p100 = scmp.ne.s32.totalorder %s89, %s90
      %p101 = scmp.eq.s32.totalorder %s32, 0
      %p102 = por %p100, %p101
      %p103 = scmp.ne.s32.totalorder %s89, %s90
      %p104 = scmp.eq.s32.totalorder %s33, 1
      %p105 = por %p103, %p104
      %p107 = scmp.ne.s32.totalorder %s90, %s106
      %p108 = scmp.eq.s32.totalorder %s33, 0
      %p109 = por %p107, %p108
      %s110 = ssub.s32 %s34, %s53
      %s111 = ssub.s32 %s36, %s45
      %s112 = sor.u32 %s110, %s111
      %p113 = scmp.eq.s32.totalorder %s112, 0
      %s115 = sadd.s32 %s114, 1
      %s116 = scalar_select %p113, %s114, %s115
      %p119 = pneg %p113
      %p120 = scmp.eq.s32.totalorder %s27, 1
      %p121 = por %p119, %p120
      %p122 = scmp.ne.s32.totalorder %s114, %s117
      %p123 = scmp.eq.s32.totalorder %s27, 0
      %p124 = por %p122, %p123
      %p125 = scmp.ne.s32.totalorder %s114, %s117
      %p126 = scmp.eq.s32.totalorder %s32, 1
      %p127 = por %p125, %p126
      %p128 = scmp.ne.s32.totalorder %s117, %s118
      %p129 = scmp.eq.s32.totalorder %s32, 0
      %p130 = por %p128, %p129
      %p131 = scmp.ne.s32.totalorder %s117, %s118
      %p132 = scmp.eq.s32.totalorder %s33, 1
      %p133 = por %p131, %p132
      %p135 = scmp.ne.s32.totalorder %s118, %s134
      %p136 = scmp.eq.s32.totalorder %s33, 0
      %p137 = por %p135, %p136
      %s139 = sadd.s32 %s138, 1
      %p142 = scmp.eq.s32.totalorder %s27, 1
      %p143 = scmp.ne.s32.totalorder %s138, %s140
      %p144 = scmp.eq.s32.totalorder %s27, 0
      %p145 = por %p143, %p144
      %p146 = scmp.ne.s32.totalorder %s138, %s140
      %p147 = scmp.eq.s32.totalorder %s32, 1
      %p148 = por %p146, %p147
      %p149 = scmp.ne.s32.totalorder %s140, %s141
      %p150 = scmp.eq.s32.totalorder %s32, 0
      %p151 = por %p149, %p150
      %p152 = scmp.ne.s32.totalorder %s140, %s141
      %p153 = scmp.eq.s32.totalorder %s33, 1
      %p154 = por %p152, %p153
      %p156 = scmp.ne.s32.totalorder %s141, %s155
      %p157 = scmp.eq.s32.totalorder %s33, 0
      %p158 = por %p156, %p157
      %s159 = ssub.s32 %s34, %s53
      %s160 = ssub.s32 %s35, %s49
      %s161 = sor.u32 %s159, %s160
      %p162 = scmp.eq.s32.totalorder %s161, 0
      %s164 = sadd.s32 %s163, 1
      %s165 = scalar_select %p162, %s163, %s164
      %p168 = pneg %p162
      %p169 = scmp.eq.s32.totalorder %s27, 1
      %p170 = por %p168, %p169
      %p171 = scmp.ne.s32.totalorder %s163, %s166
      %p172 = scmp.eq.s32.totalorder %s27, 0
      %p173 = por %p171, %p172
      %p174 = scmp.ne.s32.totalorder %s163, %s166
      %p175 = scmp.eq.s32.totalorder %s32, 1
      %p176 = por %p174, %p175
      %p177 = scmp.ne.s32.totalorder %s166, %s167
      %p178 = scmp.eq.s32.totalorder %s32, 0
      %p179 = por %p177, %p178
      %p180 = scmp.ne.s32.totalorder %s166, %s167
      %p181 = scmp.eq.s32.totalorder %s33, 1
      %p182 = por %p180, %p181
      %p184 = scmp.ne.s32.totalorder %s167, %s183
      %p185 = scmp.eq.s32.totalorder %s33, 0
      %p186 = por %p184, %p185
      %s187 = ssub.s32 %s34, %s53
      %s188 = ssub.s32 %s35, %s49
      %s189 = sor.u32 %s187, %s188
      %s190 = ssub.s32 %s36, %s45
      %s191 = sor.u32 %s189, %s190
      %p192 = scmp.eq.s32.totalorder %s191, 0
      %s194 = sadd.s32 %s193, 1
      %s195 = scalar_select %p192, %s193, %s194
      %p198 = pneg %p192
      %p199 = scmp.eq.s32.totalorder %s27, 1
      %p200 = por %p198, %p199
      %p201 = scmp.ne.s32.totalorder %s193, %s196
      %p202 = scmp.eq.s32.totalorder %s27, 0
      %p203 = por %p201, %p202
      %p204 = scmp.ne.s32.totalorder %s193, %s196
      %p205 = scmp.eq.s32.totalorder %s32, 1
      %p206 = por %p204, %p205
      %p207 = scmp.ne.s32.totalorder %s196, %s197
      %p208 = scmp.eq.s32.totalorder %s32, 0
      %p209 = por %p207, %p208
      %p210 = scmp.ne.s32.totalorder %s196, %s197
      %p211 = scmp.eq.s32.totalorder %s33, 1
      %p212 = por %p210, %p211
      %p214 = scmp.ne.s32.totalorder %s197, %s213
      %p215 = scmp.eq.s32.totalorder %s33, 0
      %p216 = por %p214, %p215
      %s217 = ssub.s32 %s34, %s53
      %s218 = ssub.s32 %s36, %s45
      %s219 = sor.u32 %s217, %s218
      %s220 = ssub.s32 %s35, %s49
      %s221 = sor.u32 %s219, %s220
      %p222 = scmp.eq.s32.totalorder %s221, 0
      %s224 = sadd.s32 %s223, 1
      %s225 = scalar_select %p222, %s223, %s224
      %p228 = pneg %p222
      %p229 = scmp.eq.s32.totalorder %s27, 1
      %p230 = por %p228, %p229
      %p231 = scmp.ne.s32.totalorder %s223, %s226
      %p232 = scmp.eq.s32.totalorder %s27, 0
      %p233 = por %p231, %p232
      %p234 = scmp.ne.s32.totalorder %s223, %s226
      %p235 = scmp.eq.s32.totalorder %s32, 1
      %p236 = por %p234, %p235
      %p237 = scmp.ne.s32.totalorder %s226, %s227
      %p238 = scmp.eq.s32.totalorder %s32, 0
      %p239 = por %p237, %p238
      %p240 = scmp.ne.s32.totalorder %s226, %s227
      %p241 = scmp.eq.s32.totalorder %s33, 1
      %p242 = por %p240, %p241
      %p244 = scmp.ne.s32.totalorder %s227, %s243
      %p245 = scmp.eq.s32.totalorder %s33, 0
      %p246 = por %p244, %p245
      %s247 = ssub.s32 %s34, %s53
      %s248 = ssub.s32 %s35, %s49
      %s249 = sor.u32 %s247, %s248
      %p250 = scmp.eq.s32.totalorder %s249, 0
      %s252 = sadd.s32 %s251, 1
      %s253 = scalar_select %p250, %s251, %s252
      %p256 = pneg %p250
      %p257 = scmp.eq.s32.totalorder %s27, 1
      %p258 = por %p256, %p257
      %p259 = scmp.ne.s32.totalorder %s251, %s254
      %p260 = scmp.eq.s32.totalorder %s27, 0
      %p261 = por %p259, %p260
      %p262 = scmp.ne.s32.totalorder %s251, %s254
      %p263 = scmp.eq.s32.totalorder %s32, 1
      %p264 = por %p262, %p263
      %p265 = scmp.ne.s32.totalorder %s254, %s255
      %p266 = scmp.eq.s32.totalorder %s32, 0
      %p267 = por %p265, %p266
      %p268 = scmp.ne.s32.totalorder %s254, %s255
      %p269 = scmp.eq.s32.totalorder %s33, 1
      %p270 = por %p268, %p269
      %p272 = scmp.ne.s32.totalorder %s255, %s271
      %p273 = scmp.eq.s32.totalorder %s33, 0
      %p274 = por %p272, %p273
      %p275 = scmp.le.s32.totalorder 1, %s27
      %p276 = scmp.lt.s32.totalorder %s27, 3
      %p277 = pnand %p275, %p276
      %p278 = pneg %p277
      // Predicated region
      $region9: #{tpu_custom_call.1} parent=5 // pred_check
        _
      $region10: #{tpu_custom_call.1} parent=5 // pred_check_branch
        %280 = sbr.rel (%p277) target = $region12
      $region11: #{tpu_custom_call.1} parent=5 // pred_region
        %s281 = ssub.s32 %s27, 1
        // Predicated region
        $region13: #{tpu_custom_call.1} parent=11 // pred_check
          %p282 = pneg %p151
        $region14: #{tpu_custom_call.1} parent=11 // pred_check_branch
          %284 = sbr.rel (%p282) target = $region16
        $region15: #{tpu_custom_call.1} parent=11 // pred_region
          %286 = vsyncadd [#allocation9], 0
          %s288 = sshll.u32 %s4, 4
          %s289 = int_to_ptr.vmem [resolvable:$true] %s288
          %291 = dma.vmem_to_smem %s289, 16, [#allocation7], [#allocation9]
        $region16: #{tpu_custom_call.1} parent=11 // pred_fallthru
          _
      $region12: #{tpu_custom_call.1} parent=5 // pred_fallthru
        _
      %p292 = scmp.lt.s32.totalorder %s27, 2
      // Predicated region
      $region17: #{tpu_custom_call.1} parent=5 // pred_check
        %p293 = pneg %p292
      $region18: #{tpu_custom_call.1} parent=5 // pred_check_branch
        %295 = sbr.rel (%p293) target = $region20
      $region19: #{tpu_custom_call.1} parent=5 // pred_region
        // Predicated region
        $region21: #{tpu_custom_call.1} parent=19 // pred_check
          %p296 = pneg %p68
        $region22: #{tpu_custom_call.1} parent=19 // pred_check_branch
          %298 = sbr.rel (%p296) target = $region24
        $region23: #{tpu_custom_call.1} parent=19 // pred_region
          %p299 = scmp.lt.s32.totalorder %s34, 1
          %s300 = scalar_select %p299, %s34, 1
          %p301 = scmp.lt.s32.totalorder %s35, 0
          %s302 = scalar_select %p301, %s35, 0
          %s303 = sadd.s32 %s302, %s300
          %s304 = smul.addr %s303, 8
          %s305 = scalar_lea.vmem %s1, %s304
        $region24: #{tpu_custom_call.1} parent=19 // pred_fallthru
          _
        // Predicated region
        $region25: #{tpu_custom_call.1} parent=19 // pred_check
          %p306 = pneg %p96
        $region26: #{tpu_custom_call.1} parent=19 // pred_check_branch
          %308 = sbr.rel (%p306) target = $region28
        $region27: #{tpu_custom_call.1} parent=19 // pred_region
          %p309 = scmp.lt.s32.totalorder %s34, 1
          %s310 = scalar_select %p309, %s34, 1
          %p311 = scmp.lt.s32.totalorder %s36, 0
          %s312 = scalar_select %p311, %s36, 0
          %s313 = sadd.s32 %s312, %s310
          %s314 = smul.addr %s313, 8
          %s315 = scalar_lea.vmem %s2, %s314
        $region28: #{tpu_custom_call.1} parent=19 // pred_fallthru
          _
        // Predicated region
        $region29: #{tpu_custom_call.1} parent=19 // pred_check
          %p316 = pneg %p124
        $region30: #{tpu_custom_call.1} parent=19 // pred_check_branch
          %318 = sbr.rel (%p316) target = $region32
        $region31: #{tpu_custom_call.1} parent=19 // pred_region
          %s319 = smul.u32 16, %s36
          %p320 = scmp.lt.s32.totalorder %s34, 1
          %s321 = scalar_select %p320, %s34, 1
          %p322 = scmp.lt.s32.totalorder %s319, 15
          %s323 = scalar_select %p322, %s319, 15
          %s324 = smul.addr %s321, 16
          %s325 = sadd.s32 %s323, %s324
          %s326 = smul.addr %s325, 8
          %s327 = scalar_lea.vmem %s3, %s326
          %s328 = smul.u32 16, %s36
        $region32: #{tpu_custom_call.1} parent=19 // pred_fallthru
          _
      $region20: #{tpu_custom_call.1} parent=5 // pred_fallthru
        _
      %p329 = scmp.le.s32.totalorder 1, %s27
      %p330 = scmp.lt.s32.totalorder %s27, 3
      %p331 = pnand %p329, %p330
      %p332 = pneg %p331
      // Predicated region
      $region33: #{tpu_custom_call.1} parent=5 // pred_check
        _
      $region34: #{tpu_custom_call.1} parent=5 // pred_check_branch
        %334 = sbr.rel (%p331) target = $region36
      $region35: #{tpu_custom_call.1} parent=5 // pred_region
        %s335 = ssub.s32 %s27, 1
        // Predicated region
        $region37: #{tpu_custom_call.1} parent=35 // pred_check
          %p336 = pneg %p151
        $region38: #{tpu_custom_call.1} parent=35 // pred_check_branch
          %338 = sbr.rel (%p336) target = $region40
        $region39: #{tpu_custom_call.1} parent=35 // pred_region
          %340 = dma.done [#allocation9], 16
        $region40: #{tpu_custom_call.1} parent=35 // pred_fallthru
          _
        %341 = sfence
        %p342 = scmp.lt.s32.totalorder %s37, 1
        %s343 = scalar_select %p342, %s37, 1
        %p344 = scmp.lt.s32.totalorder %s38, 0
        %s345 = scalar_select %p344, %s38, 0
        %s346 = sadd.s32 %s345, %s343
        %s347 = smul.addr %s346, 8
        %s348 = scalar_lea.vmem %s1, %s347
        %p349 = pneg %p74
        %p350 = pneg %p71
        %p351 = scmp.lt.s32.totalorder %s37, 1
        %s352 = scalar_select %p351, %s37, 1
        %p353 = scmp.lt.s32.totalorder %s39, 0
        %s354 = scalar_select %p353, %s39, 0
        %s355 = sadd.s32 %s354, %s352
        %s356 = smul.addr %s355, 8
        %s357 = scalar_lea.vmem %s2, %s356
        %p358 = pneg %p102
        %p359 = pneg %p99
        %s360 = smul.u32 16, %s39
        %p361 = scmp.lt.s32.totalorder %s37, 1
        %s362 = scalar_select %p361, %s37, 1
        %p363 = scmp.lt.s32.totalorder %s360, 15
        %s364 = scalar_select %p363, %s360, 15
        %s365 = smul.addr %s362, 16
        %s366 = sadd.s32 %s364, %s365
        %s367 = smul.addr %s366, 8
        %s368 = scalar_lea.vmem %s3, %s367
        %p369 = pneg %p130
        %p370 = pneg %p127
        %p371 = pneg %p151
        %p372 = pneg %p148
        %p373 = pneg %p179
        %p374 = pneg %p176
        %p375 = scmp.lt.s32.totalorder %s37, 1
        %s376 = scalar_select %p375, %s37, 1
        %p377 = scmp.lt.s32.totalorder %s38, 0
        %s378 = scalar_select %p377, %s38, 0
        %s379 = sadd.s32 %s378, %s376
        %s380 = smul.addr %s379, 8
        %s381 = scalar_lea.vmem %s5, %s380
        %p382 = pneg %p209
        %p383 = pneg %p206
        %s384 = sand.u32 %s196, 1
        %s385 = scalar_lea.sflag [#allocation8], %s384
        %s386 = sand.u32 %s196, 1
        %s387 = smul.addr %s386, 8
        %s388 = scalar_lea.vmem [#allocation10], %s387
        %p389 = pneg %p239
        %p390 = pneg %p236
        %p391 = scmp.lt.s32.totalorder %s37, 1
        %s392 = scalar_select %p391, %s37, 1
        %p393 = scmp.lt.s32.totalorder %s39, 0
        %s394 = scalar_select %p393, %s39, 0
        %p395 = scmp.lt.s32.totalorder %s38, 0
        %s396 = scalar_select %p395, %s38, 0
        %s397 = sadd.s32 %s396, %s394
        %s398 = sadd.s32 %s397, %s392
        %s399 = smul.addr %s398, 8
        %s400 = scalar_lea.vmem %s7, %s399
        %p401 = pneg %p267
        %p402 = pneg %p264
        %p403 = scmp.lt.s32.totalorder %s37, 1
        %s404 = scalar_select %p403, %s37, 1
        %p405 = scmp.lt.s32.totalorder %s38, 0
        %s406 = scalar_select %p405, %s38, 0
        %s407 = sadd.s32 %s406, %s404
        %s408 = smul.addr %s407, 8
        %s409 = scalar_lea.vmem %s8, %s408
        %p410 = scmp.lt.s32.totalorder %s37, 1
        %s411 = scalar_select %p410, %s37, 1
        %p412 = scmp.lt.s32.totalorder %s38, 0
        %s413 = scalar_select %p412, %s38, 0
        %s414 = sadd.s32 %s413, %s411
        %s415 = smul.addr %s414, 8
        %s416 = scalar_lea.vmem %s1, %s415
        %p417 = scmp.lt.s32.totalorder %s37, 1
        %s418 = scalar_select %p417, %s37, 1
        %p419 = scmp.lt.s32.totalorder %s39, 0
        %s420 = scalar_select %p419, %s39, 0
        %s421 = sadd.s32 %s420, %s418
        %s422 = smul.addr %s421, 8
        %s423 = scalar_lea.vmem %s2, %s422
        %s424 = smul.u32 16, %s39
        %p425 = scmp.lt.s32.totalorder %s37, 1
        %s426 = scalar_select %p425, %s37, 1
        %p427 = scmp.lt.s32.totalorder %s424, 15
        %s428 = scalar_select %p427, %s424, 15
        %s429 = smul.addr %s426, 16
        %s430 = sadd.s32 %s428, %s429
        %s431 = smul.addr %s430, 8
        %s432 = scalar_lea.vmem %s3, %s431
        %s433 = smul.u32 16, %s39
        %p434 = scmp.lt.s32.totalorder %s37, 1
        %s435 = scalar_select %p434, %s37, 1
        %p436 = scmp.lt.s32.totalorder %s38, 0
        %s437 = scalar_select %p436, %s38, 0
        %s438 = sadd.s32 %s437, %s435
        %s439 = smul.addr %s438, 8
        %s440 = scalar_lea.vmem %s5, %s439
        %p441 = scmp.lt.s32.totalorder %s37, 1
        %s442 = scalar_select %p441, %s37, 1
        %p443 = scmp.lt.s32.totalorder %s39, 0
        %s444 = scalar_select %p443, %s39, 0
        %p445 = scmp.lt.s32.totalorder %s38, 0
        %s446 = scalar_select %p445, %s38, 0
        %s447 = sadd.s32 %s446, %s444
        %s448 = sadd.s32 %s447, %s442
        %s449 = smul.addr %s448, 8
        %s450 = scalar_lea.vmem %s7, %s449
        %p451 = scmp.lt.s32.totalorder %s37, 1
        %s452 = scalar_select %p451, %s37, 1
        %p453 = scmp.lt.s32.totalorder %s38, 0
        %s454 = scalar_select %p453, %s38, 0
        %s455 = sadd.s32 %s454, %s452
        %s456 = smul.addr %s455, 8
        %s457 = scalar_lea.vmem %s8, %s456
        %p458 = scmp.eq.s32.totalorder %s39, 0
        // Predicated region
        $region41: #{tpu_custom_call.1} parent=35 // pred_check
          %p459 = pneg %p458
        $region42: #{tpu_custom_call.1} parent=35 // pred_check_branch
          %461 = sbr.rel (%p459) target = $region44
        $region43: #{tpu_custom_call.1} parent=35 // pred_region
          %vm462 = vcmask 7168
          %463 = vst.msk [vmem:[#allocation2] sm:$0xff] %vm462, -inf
          %464 = vst.msk [vmem:[#allocation3] sm:$0xff] %vm462, 0.0
          %vm465 = vcmask 31744
          %466 = vst.msk [vmem:[#allocation4] sm:$0xff] %vm465, 0.0
        $region44: #{tpu_custom_call.1} parent=35 // pred_fallthru
          _
        %v467 = vld [vmem:[%s416] sm:$0xff]
        %v468 = vld [vmem:[%s423] sm:$0xff]
        %470 = vset.pattern.permute.xlu0 0
        %471 = vperm.xlu0 %470, %v467
        %v472 = vpop.permute.xlu0 %471
        %v474 = vperm.slane %v468, 0
        %v475 = vadd.f32 %v472, %v474
        %v476 = vtanh.pop %v475
        %s477 = sld [smem:[#allocation7]]
        %v478 = vstv %s477
        %v479 = vmul.f32 %v478, %v476
        %480 = vset.pattern.permute.xlu0 1
        %481 = vperm.xlu0 %480, %v467
        %v482 = vpop.permute.xlu0 %481
        %v484 = vperm.slane %v468, 1
        %v485 = vadd.f32 %v482, %v484
        %v486 = vtanh.pop %v485
        %s487 = sld [smem:[#allocation7 + $0x1]]
        %v488 = vstv %s487
        %v489 = vmul.f32 %v488, %v486
        %v490 = vadd.f32 %v479, %v489
        %491 = vset.pattern.permute.xlu0 2
        %492 = vperm.xlu0 %491, %v467
        %v493 = vpop.permute.xlu0 %492
        %v495 = vperm.slane %v468, 2
        %v496 = vadd.f32 %v493, %v495
        %v497 = vtanh.pop %v496
        %s498 = sld [smem:[#allocation7 + $0x2]]
        %v499 = vstv %s498
        %v500 = vmul.f32 %v499, %v497
        %v501 = vadd.f32 %v490, %v500
        %502 = vset.pattern.permute.xlu0 3
        %503 = vperm.xlu0 %502, %v467
        %v504 = vpop.permute.xlu0 %503
        %v506 = vperm.slane %v468, 3
        %v507 = vadd.f32 %v504, %v506
        %v508 = vtanh.pop %v507
        %s509 = sld [smem:[#allocation7 + $0x3]]
        %v510 = vstv %s509
        %v511 = vmul.f32 %v510, %v508
        %v512 = vadd.f32 %v501, %v511
        %513 = vset.pattern.permute.xlu0 4
        %514 = vperm.xlu0 %513, %v467
        %v515 = vpop.permute.xlu0 %514
        %v517 = vperm.slane %v468, 4
        %v518 = vadd.f32 %v515, %v517
        %v519 = vtanh.pop %v518
        %s520 = sld [smem:[#allocation7 + $0x4]]
        %v521 = vstv %s520
        %v522 = vmul.f32 %v521, %v519
        %v523 = vadd.f32 %v512, %v522
        %524 = vset.pattern.permute.xlu0 5
        %525 = vperm.xlu0 %524, %v467
        %v526 = vpop.permute.xlu0 %525
        %v528 = vperm.slane %v468, 5
        %v529 = vadd.f32 %v526, %v528
        %v530 = vtanh.pop %v529
        %s531 = sld [smem:[#allocation7 + $0x5]]
        %v532 = vstv %s531
        %v533 = vmul.f32 %v532, %v530
        %v534 = vadd.f32 %v523, %v533
        %535 = vset.pattern.permute.xlu0 6
        %536 = vperm.xlu0 %535, %v467
        %v537 = vpop.permute.xlu0 %536
        %v539 = vperm.slane %v468, 6
        %v540 = vadd.f32 %v537, %v539
        %v541 = vtanh.pop %v540
        %s542 = sld [smem:[#allocation7 + $0x6]]
        %v543 = vstv %s542
        %v544 = vmul.f32 %v543, %v541
        %v545 = vadd.f32 %v534, %v544
        %546 = vset.pattern.permute.xlu0 7
        %547 = vperm.xlu0 %546, %v467
        %v548 = vpop.permute.xlu0 %547
        %v550 = vperm.slane %v468, 7
        %v551 = vadd.f32 %v548, %v550
        %v552 = vtanh.pop %v551
        %s553 = sld [smem:[#allocation7 + $0x7]]
        %v554 = vstv %s553
        %v555 = vmul.f32 %v554, %v552
        %v556 = vadd.f32 %v545, %v555
        %s557 = sld [smem:[#allocation6 + %s37]]
        %s558 = smul.u32 %s39, 128
        %v559 = vlaneseq
        %v560 = vand.u32 %v559, 127
        %v561 = vstv %s558
        %v562 = vadd.s32 %v561, %v560
        %v563 = vstv %s557
        %vm564 = vcmp.lt.s32.totalorder %v562, %v563
        %v565 = vsel %vm564, %v556, -1000000.0
        %v566 = vld [vmem:[#allocation2] sm:$0xff]
        %567 = vmax.xlane.f32.xlu0 %v565
        %v568 = vpop.xlane.xlu0 %567
        %v569 = vmax.f32 %v566, %v568
        %v570 = vsub.f32 %v566, %v569
        %v571 = vmul.f32 %v570, 1.442695
        %v572 = vpow.pop %v571
        %574 = vset.pattern.permute.xlu0 0
        %575 = vperm.xlu0 %574, %v569
        %v576 = vpop.permute.xlu0 %575
        %v578 = vsub.f32 %v565, %v576
        %v579 = vmul.f32 %v578, 1.442695
        %v580 = vpow.pop %v579
        %v581 = vld [vmem:[#allocation3] sm:$0xff]
        %v582 = vmul.f32 %v572, %v581
        %583 = vadd.xlane.f32.xlu0 %v580
        %v584 = vpop.xlane.xlu0 %583
        %v585 = vadd.f32 %v582, %v584
        %vm586 = vcmask 7168
        %587 = vst.msk [vmem:[#allocation3] sm:$0xff] %vm586, %v585
        %v588 = vld [vmem:[#allocation4] sm:$0xff]
        %590 = vset.pattern.permute.xlu0 0
        %591 = vperm.xlu0 %590, %v572
        %v592 = vpop.permute.xlu0 %591
        %v594 = vmul.f32 %v592, %v588
        %v595 = vld [vmem:[%s432] sm:$0xff]
        %v596 = vld [vmem:[%s432 + $0x8] sm:$0xff]
        %v597 = vld [vmem:[%s432 + $0x10] sm:$0xff]
        %v598 = vld [vmem:[%s432 + $0x18] sm:$0xff]
        %v599 = vld [vmem:[%s432 + $0x20] sm:$0xff]
        %v600 = vld [vmem:[%s432 + $0x28] sm:$0xff]
        %v601 = vld [vmem:[%s432 + $0x30] sm:$0xff]
        %v602 = vld [vmem:[%s432 + $0x38] sm:$0xff]
        %v603 = vld [vmem:[%s432 + $0x40] sm:$0xff]
        %v604 = vld [vmem:[%s432 + $0x48] sm:$0xff]
        %v605 = vld [vmem:[%s432 + $0x50] sm:$0xff]
        %v606 = vld [vmem:[%s432 + $0x58] sm:$0xff]
        %v607 = vld [vmem:[%s432 + $0x60] sm:$0xff]
        %v608 = vld [vmem:[%s432 + $0x68] sm:$0xff]
        %v609 = vld [vmem:[%s432 + $0x70] sm:$0xff]
        %v610 = vld [vmem:[%s432 + $0x78] sm:$0xff]
        %611 = vmatpush.msra.mxu0 %v610
        %612 = vmatpush.msra.mxu0 %v609
        %613 = vmatpush.msra.mxu0 %v608
        %614 = vmatpush.msra.mxu0 %v607
        %615 = vmatpush.msra.mxu0 %v606
        %616 = vmatpush.msra.mxu0 %v605
        %617 = vmatpush.msra.mxu0 %v604
        %618 = vmatpush.msra.mxu0 %v603
        %619 = vmatpush.msra.mxu0 %v602
        %620 = vmatpush.msra.mxu0 %v601
        %621 = vmatpush.msra.mxu0 %v600
        %622 = vmatpush.msra.mxu0 %v599
        %623 = vmatpush.msra.mxu0 %v598
        %624 = vmatpush.msra.mxu0 %v597
        %625 = vmatpush.msra.mxu0 %v596
        %626 = vmatpush.msra.mxu0 %v595
        %627 = vmatmul.f32.gmra.mxu0 %v580
        %v628 = vpop.f32.mrf.mxu0
        %v629 = vadd.f32 0.0, %v628
        %630 = vdwg.mxu0
        %v631 = vadd.f32 %v594, %v629
        %vm632 = vcmask 31744
        %633 = vst.msk [vmem:[#allocation4] sm:$0xff] %vm632, %v631
        %634 = vst.msk [vmem:[#allocation2] sm:$0xff] %vm586, %v569
        %635 = vst [vmem:[%s388] sm:$0xff] %v580
        %636 = vst.msk [vmem:[%s450] sm:$0xff] %vm586, %v569
        %v637 = vld [vmem:[#allocation3] sm:$0xff]
        %638 = vst.msk [vmem:[%s457] sm:$0xff] %vm586, %v637
        // Predicated region
        $region45: #{tpu_custom_call.1} parent=35 // pred_check
          %p639 = pneg %p458
        $region46: #{tpu_custom_call.1} parent=35 // pred_check_branch
          %641 = sbr.rel (%p639) target = $region48
        $region47: #{tpu_custom_call.1} parent=35 // pred_region
          %v642 = vld [vmem:[#allocation3] sm:$0xff]
          %v643 = vrcp.pop %v642
          %v644 = vld [vmem:[#allocation4] sm:$0xff]
          %646 = vset.pattern.permute.xlu0 0
          %647 = vperm.xlu0 %646, %v643
          %v648 = vpop.permute.xlu0 %647
          %v650 = vmul.f32 %v644, %v648
          %651 = vst.msk [vmem:[%s440] sm:$0xff] %vm632, %v650
        $region48: #{tpu_custom_call.1} parent=35 // pred_fallthru
          _
        %p652 = scmp.lt.s32.totalorder %s37, 1
        %s653 = scalar_select %p652, %s37, 1
        %p654 = scmp.lt.s32.totalorder %s38, 0
        %s655 = scalar_select %p654, %s38, 0
        %s656 = sadd.s32 %s655, %s653
        %s657 = smul.addr %s656, 8
        %s658 = scalar_lea.vmem %s5, %s657
        %s659 = sand.u32 %s196, 1
        %s660 = scalar_lea.sflag [#allocation8], %s659
        %s661 = sand.u32 %s196, 1
        %s662 = smul.addr %s661, 8
        %s663 = scalar_lea.vmem [#allocation10], %s662
        %p664 = scmp.lt.s32.totalorder %s37, 1
        %s665 = scalar_select %p664, %s37, 1
        %p666 = scmp.lt.s32.totalorder %s39, 0
        %s667 = scalar_select %p666, %s39, 0
        %p668 = scmp.lt.s32.totalorder %s38, 0
        %s669 = scalar_select %p668, %s38, 0
        %s670 = sadd.s32 %s669, %s667
        %s671 = sadd.s32 %s670, %s665
        %s672 = smul.addr %s671, 8
        %s673 = scalar_lea.vmem %s7, %s672
        %p674 = scmp.lt.s32.totalorder %s37, 1
        %s675 = scalar_select %p674, %s37, 1
        %p676 = scmp.lt.s32.totalorder %s38, 0
        %s677 = scalar_select %p676, %s38, 0
        %s678 = sadd.s32 %s677, %s675
        %s679 = smul.addr %s678, 8
        %s680 = scalar_lea.vmem %s8, %s679
        // Predicated region
        $region49: #{tpu_custom_call.1} parent=35 // pred_check
          %p681 = pneg %p176
        $region50: #{tpu_custom_call.1} parent=35 // pred_check_branch
          %683 = sbr.rel (%p681) target = $region52
        $region51: #{tpu_custom_call.1} parent=35 // pred_region
          _
        $region52: #{tpu_custom_call.1} parent=35 // pred_fallthru
          _
        // Predicated region
        $region53: #{tpu_custom_call.1} parent=35 // pred_check
          %p684 = pneg %p206
        $region54: #{tpu_custom_call.1} parent=35 // pred_check_branch
          %686 = sbr.rel (%p684) target = $region56
        $region55: #{tpu_custom_call.1} parent=35 // pred_region
          %688 = vsyncadd %s660, 0
          %s689 = sadd.s32 %s39, %s38
          %s690 = sadd.s32 %s689, %s37
          %s691 = smul.addr %s690, 8
          %s692 = scalar_lea.hbm %s6, %s691
          %s694 = sshll.u32 %s663, 4
          %s695 = int_to_ptr.vmem [resolvable:$true] %s694
          %s696 = sshll.u32 %s692, 4
          %s697 = int_to_ptr.hbm [resolvable:$true] %s696
          %699 = dma.vmem_to_hbm [thread:$0]  %s695, 128, %s697, %s660
        $region56: #{tpu_custom_call.1} parent=35 // pred_fallthru
          _
        // Predicated region
        $region57: #{tpu_custom_call.1} parent=35 // pred_check
          %p700 = pneg %p236
        $region58: #{tpu_custom_call.1} parent=35 // pred_check_branch
          %702 = sbr.rel (%p700) target = $region60
        $region59: #{tpu_custom_call.1} parent=35 // pred_region
          _
        $region60: #{tpu_custom_call.1} parent=35 // pred_fallthru
          _
        // Predicated region
        $region61: #{tpu_custom_call.1} parent=35 // pred_check
          %p703 = pneg %p264
        $region62: #{tpu_custom_call.1} parent=35 // pred_check_branch
          %705 = sbr.rel (%p703) target = $region64
        $region63: #{tpu_custom_call.1} parent=35 // pred_region
          _
        $region64: #{tpu_custom_call.1} parent=35 // pred_fallthru
          _
      $region36: #{tpu_custom_call.1} parent=5 // pred_fallthru
        _
      %p706 = scmp.le.s32.totalorder 2, %s27
      // Predicated region
      $region65: #{tpu_custom_call.1} parent=5 // pred_check
        %p707 = pneg %p706
      $region66: #{tpu_custom_call.1} parent=5 // pred_check_branch
        %709 = sbr.rel (%p707) target = $region68
      $region67: #{tpu_custom_call.1} parent=5 // pred_region
        %s710 = ssub.s32 %s27, 2
        // Predicated region
        $region69: #{tpu_custom_call.1} parent=67 // pred_check
          %p711 = pneg %p182
        $region70: #{tpu_custom_call.1} parent=67 // pred_check_branch
          %713 = sbr.rel (%p711) target = $region72
        $region71: #{tpu_custom_call.1} parent=67 // pred_region
          %p714 = scmp.lt.s32.totalorder %s40, 1
          %s715 = scalar_select %p714, %s40, 1
          %p716 = scmp.lt.s32.totalorder %s41, 0
          %s717 = scalar_select %p716, %s41, 0
          %s718 = sadd.s32 %s717, %s715
          %s719 = smul.addr %s718, 8
          %s720 = scalar_lea.vmem %s5, %s719
        $region72: #{tpu_custom_call.1} parent=67 // pred_fallthru
          _
        // Predicated region
        $region73: #{tpu_custom_call.1} parent=67 // pred_check
          %p721 = pneg %p212
        $region74: #{tpu_custom_call.1} parent=67 // pred_check_branch
          %723 = sbr.rel (%p721) target = $region76
        $region75: #{tpu_custom_call.1} parent=67 // pred_region
          %s724 = sand.u32 %s197, 1
          %s725 = scalar_lea.sflag [#allocation8], %s724
          %s726 = sand.u32 %s197, 1
          %s727 = smul.addr %s726, 8
          %s728 = scalar_lea.vmem [#allocation10], %s727
          %730 = dma.done %s725, 128
        $region76: #{tpu_custom_call.1} parent=67 // pred_fallthru
          _
        // Predicated region
        $region77: #{tpu_custom_call.1} parent=67 // pred_check
          %p731 = pneg %p242
        $region78: #{tpu_custom_call.1} parent=67 // pred_check_branch
          %733 = sbr.rel (%p731) target = $region80
        $region79: #{tpu_custom_call.1} parent=67 // pred_region
          %p734 = scmp.lt.s32.totalorder %s40, 1
          %s735 = scalar_select %p734, %s40, 1
          %p736 = scmp.lt.s32.totalorder %s42, 0
          %s737 = scalar_select %p736, %s42, 0
          %p738 = scmp.lt.s32.totalorder %s41, 0
          %s739 = scalar_select %p738, %s41, 0
          %s740 = sadd.s32 %s739, %s737
          %s741 = sadd.s32 %s740, %s735
          %s742 = smul.addr %s741, 8
          %s743 = scalar_lea.vmem %s7, %s742
        $region80: #{tpu_custom_call.1} parent=67 // pred_fallthru
          _
        // Predicated region
        $region81: #{tpu_custom_call.1} parent=67 // pred_check
          %p744 = pneg %p270
        $region82: #{tpu_custom_call.1} parent=67 // pred_check_branch
          %746 = sbr.rel (%p744) target = $region84
        $region83: #{tpu_custom_call.1} parent=67 // pred_region
          %p747 = scmp.lt.s32.totalorder %s40, 1
          %s748 = scalar_select %p747, %s40, 1
          %p749 = scmp.lt.s32.totalorder %s41, 0
          %s750 = scalar_select %p749, %s41, 0
          %s751 = sadd.s32 %s750, %s748
          %s752 = smul.addr %s751, 8
          %s753 = scalar_lea.vmem %s8, %s752
        $region84: #{tpu_custom_call.1} parent=67 // pred_fallthru
          _
      $region68: #{tpu_custom_call.1} parent=5 // pred_fallthru
        _
    $region6: #{tpu_custom_call.1} parent=1 // loop_footer
      %s31 = sadd.s32 1, %s27
    $region7: #{tpu_custom_call.1} parent=1 // loop_footer_branch
      %26 = sbr.rel target = $region3
    $region8: #{tpu_custom_call.1} parent=1 // loop_exit
      _
    %754 = vsyncpa [#allocation8], 1
    %s755 = scalar_lea.sflag [#allocation8], 1
    %756 = vsyncpa %s755, 1
    %757 = vsyncpa [#allocation9], 1
    %s758 = scalar_lea.sflag [#allocation9], 1
    %759 = vsyncpa %s758, 1

</llo_original>
